<compile_context>
chip_gen: v7x
topology: tpu7x:2x2x1
jax: 0.10.0
libtpu: 0.0.40
codegen_flags: <defaults>
</compile_context>

<pallas_src>
import functools

import jax
import jax.numpy as jnp
from jax.experimental import pallas as pl
from jax.experimental.pallas import tpu as pltpu

LN_EPS = 1e-5  # PyTorch nn.LayerNorm default


def _sgu_kernel(gate_ref, res_ref, wt_ref, bias_ref, gamma_ref, beta_ref,
                o_ref, *, heads, head_dim):
    """One (head, batch) grid step, everything in transposed (feature, seq) layout.

    gate_ref : (dim_out, N)  gate half (full feature axis, for LN statistics)
    res_ref  : (d, N)        residual rows belonging to this head
    wt_ref   : (N, N)        W_h^T (contraction over rows, lanes = output seq)
    bias_ref : (1, N)        per-head bias row (lane-dense)
    gamma_ref/beta_ref : (d, 1)  LayerNorm affine params for this head's rows
    o_ref    : (d, N)        output rows for this head (lane-dense slab store)
    """
    h = pl.program_id(0)

    # ---- LayerNorm statistics over the full feature axis, fused single pass.
    g_full = gate_ref[...].astype(jnp.float32)                # (dim_out, N)
    dim_out = g_full.shape[0]
    inv_d = 1.0 / dim_out
    s1 = jnp.sum(g_full, axis=0, keepdims=True)               # (1, N)
    s2 = jnp.sum(g_full * g_full, axis=0, keepdims=True)      # (1, N)
    mean = s1 * inv_d
    var = jnp.maximum(s2 * inv_d - mean * mean, 0.0)
    rstd = jax.lax.rsqrt(var + LN_EPS)

    # ---- Normalize only this head's rows; apply per-row affine params.
    if heads == 1:
        g_head = g_full
    else:
        # head_dim is asserted to be a multiple of 8 in the wrapper.
        start = pl.multiple_of(h * head_dim, head_dim)
        g_head = gate_ref[pl.ds(start, head_dim), :].astype(jnp.float32)
    g_ln = (g_head - mean) * rstd * gamma_ref[...] + beta_ref[...]   # (d, N)

    # ---- Spatial projection on the MXU in the input dtype (bf16-friendly),
    # f32 accumulation.  Free/lane dim is N.
    g_mm = g_ln.astype(gate_ref.dtype)
    out = jnp.dot(g_mm, wt_ref[...], preferred_element_type=jnp.float32)  # (d, N)
    out = out + bias_ref[...].astype(jnp.float32)

    # ---- Gating with the residual half (act = Identity); lane-dense store.
    o_ref[...] = (out * res_ref[...]).astype(o_ref.dtype)


def spatial_gating_unit(x, weight, bias, ln_gamma, ln_beta, heads=1):
    """x: (B, N, DIM); weight: (H, N, N); bias: (H, N); ln_*: (DIM//2,)."""
    B, N, DIM = x.shape
    dim_out = DIM // 2
    assert dim_out % heads == 0
    d = dim_out // heads
    if heads > 1:
        assert d % 8 == 0, "per-head dim must be a multiple of 8 when heads > 1"
    assert weight.shape == (heads, N, N)

    # ---- Layout plumbing (XLA side): transposed (feature, sequence) slabs so
    # the kernel's matmul free/lane dim is N and the output store is lane-dense.
    res_t = jnp.swapaxes(x[..., :dim_out], 1, 2)        # (B, dim_out, N)
    gate_t = jnp.swapaxes(x[..., dim_out:], 1, 2)       # (B, dim_out, N)
    w_t = jnp.swapaxes(weight, 1, 2)                    # (H, N, N); w_t[h] = W_h^T
    bias_r = bias[:, None, :]                           # (H, 1, N) lane-dense rows
    gamma_c = ln_gamma.astype(jnp.float32)[:, None]     # (dim_out, 1)
    beta_c = ln_beta.astype(jnp.float32)[:, None]       # (dim_out, 1)

    kernel = functools.partial(_sgu_kernel, heads=heads, head_dim=d)

    # ---- Explicit VMEM budget: double-buffered blocks + headroom, capped at
    # v7x's 64 MiB physical VMEM.
    itm = x.dtype.itemsize
    blk_bytes = (dim_out * N * itm          # gate block
                 + d * N * itm              # res block
                 + N * N * weight.dtype.itemsize   # one head's weight
                 + N * bias.dtype.itemsize  # bias row
                 + 2 * d * 4                # gamma/beta columns (f32)
                 + d * N * itm)             # output block
    vmem_limit = int(min(max(4 * blk_bytes + (4 << 20), 16 << 20), 64 << 20))

    out_t = pl.pallas_call(
        kernel,
        out_shape=jax.ShapeDtypeStruct((B, dim_out, N), x.dtype),
        grid_spec=pltpu.PrefetchScalarGridSpec(
            num_scalar_prefetch=0,
            # heads outer / batch inner: the weight block index only changes on
            # the outer axis, so each W_h^T is fetched once and reused across
            # the whole batch sweep (no per-step weight re-DMA, no H*N*N
            # resident weight).
            grid=(heads, B),
            in_specs=[
                # gate half, full feature axis (needed for LN statistics)
                pl.BlockSpec((pl.Squeezed(), dim_out, N), lambda h, b: (b, 0, 0)),
                # residual rows for this head
                pl.BlockSpec((pl.Squeezed(), d, N), lambda h, b: (b, h, 0)),
                # this head's transposed weight
                pl.BlockSpec((pl.Squeezed(), N, N), lambda h, b: (h, 0, 0)),
                # this head's bias row (lane-dense)
                pl.BlockSpec((pl.Squeezed(), 1, N), lambda h, b: (h, 0, 0)),
                # LayerNorm affine params for this head's rows
                pl.BlockSpec((d, 1), lambda h, b: (h, 0)),
                pl.BlockSpec((d, 1), lambda h, b: (h, 0)),
            ],
            out_specs=pl.BlockSpec((pl.Squeezed(), d, N), lambda h, b: (b, h, 0)),
        ),
        compiler_params=pltpu.CompilerParams(
            dimension_semantics=("parallel", "parallel"),
            vmem_limit_bytes=vmem_limit),
    )(gate_t, res_t, w_t, bias_r, gamma_c, beta_c)

    return jnp.swapaxes(out_t, 1, 2)                    # (B, N, dim_out)


def _reference(x, weight, bias, ln_gamma, ln_beta, heads=1):
    """Pure-JAX reference mirroring the PyTorch forward (causal=False, act=Identity)."""
    B, N, DIM = x.shape
    dim_out = DIM // 2
    res = x[..., :dim_out]
    gate = x[..., dim_out:]
    mean = jnp.mean(gate, axis=-1, keepdims=True)
    var = jnp.mean((gate - mean) ** 2, axis=-1, keepdims=True)
    gate = (gate - mean) / jnp.sqrt(var + LN_EPS) * ln_gamma + ln_beta
    d = dim_out // heads
    gate = gate.reshape(B, N, heads, d).transpose(0, 2, 1, 3)        # b h n d
    gate = jnp.einsum('bhnd,hmn->bhmd', gate, weight)
    gate = gate + bias[None, :, :, None]
    gate = gate.transpose(0, 2, 1, 3).reshape(B, N, dim_out)
    return gate * res


def _run_case(heads, dtype, atol, rtol, name):
    # Module config (defaults): causal=False, act=Identity, circulant=False.
    batch, dim_seq, dim = 2, 8, 32
    dim_out = dim // 2
    init_eps = 0.001 / dim_seq

    key = jax.random.PRNGKey(0)
    kx, kw = jax.random.split(key)

    x = jax.random.normal(kx, (batch, dim_seq, dim), dtype=jnp.float32).astype(dtype)
    weight = jax.random.uniform(kw, (heads, dim_seq, dim_seq), dtype=jnp.float32,
                                minval=-init_eps, maxval=init_eps).astype(dtype)
    bias = jnp.ones((heads, dim_seq), dtype=dtype)
    ln_gamma = jnp.ones((dim_out,), dtype=jnp.float32)
    ln_beta = jnp.zeros((dim_out,), dtype=jnp.float32)

    out = spatial_gating_unit(x, weight, bias, ln_gamma, ln_beta, heads=heads)
    out = jax.block_until_ready(out)
    assert out.shape == (batch, dim_seq, dim_out)

    ref = _reference(x.astype(jnp.float32), weight.astype(jnp.float32),
                     bias.astype(jnp.float32), ln_gamma, ln_beta, heads=heads)
    assert jnp.allclose(out.astype(jnp.float32), ref, atol=atol, rtol=rtol), \
        f"mismatch vs reference ({name})"


if __name__ == "__main__":
    _run_case(heads=1, dtype=jnp.float32, atol=1e-5, rtol=1e-5, name="f32 heads=1")
    _run_case(heads=2, dtype=jnp.float32, atol=1e-5, rtol=1e-5, name="f32 heads=2")
    _run_case(heads=1, dtype=jnp.bfloat16, atol=5e-2, rtol=5e-2, name="bf16 heads=1")
    print("KERNEL_OK")
</pallas_src>

<mosaic_0001>
module attributes {stable_mosaic.version = 11 : i64} {
  func.func @_sgu_kernel(%arg0: i32, %arg1: i32, %arg2: memref<1x16x8xf32, #tpu.memory_space<vmem>>, %arg3: memref<1x16x8xf32, #tpu.memory_space<vmem>>, %arg4: memref<1x8x8xf32, #tpu.memory_space<vmem>>, %arg5: memref<1x1x8xf32, #tpu.memory_space<vmem>>, %arg6: memref<16x1xf32, #tpu.memory_space<vmem>>, %arg7: memref<16x1xf32, #tpu.memory_space<vmem>>, %arg8: memref<1x16x8xf32, #tpu.memory_space<vmem>>) attributes {dimension_semantics = [#tpu.dimension_semantics<parallel>, #tpu.dimension_semantics<parallel>], iteration_bounds = array<i64: 1, 2>, scalar_prefetch = 0 : i64, scratch_operands = 0 : i64, tpu.core_type = #tpu.core_type<tc>, window_params = [{transform_indices = @transform_0, window_bounds = array<i64: 1, 16, 8>}, {transform_indices = @transform_1, window_bounds = array<i64: 1, 16, 8>}, {transform_indices = @transform_2, window_bounds = array<i64: 1, 8, 8>}, {transform_indices = @transform_3, window_bounds = array<i64: 1, 1, 8>}, {transform_indices = @transform_4, window_bounds = array<i64: 16, 1>}, {transform_indices = @transform_5, window_bounds = array<i64: 16, 1>}, {transform_indices = @transform_6, window_bounds = array<i64: 1, 16, 8>}]} {
    %c0 = arith.constant 0 : index
    %c0_0 = arith.constant 0 : index
    %c0_1 = arith.constant 0 : index
    %0 = vector.load %arg2[%c0, %c0_0, %c0_1] : memref<1x16x8xf32, #tpu.memory_space<vmem>>, vector<1x16x8xf32>
    %1 = vector.shape_cast %0 : vector<1x16x8xf32> to vector<16x8xf32>
    %cst = arith.constant dense<0.000000e+00> : vector<8xf32>
    %2 = vector.multi_reduction <add>, %1, %cst [0] : vector<16x8xf32> to vector<8xf32>
    %3 = vector.shape_cast %2 : vector<8xf32> to vector<1x8xf32>
    %4 = arith.mulf %1, %1 : vector<16x8xf32>
    %cst_2 = arith.constant dense<0.000000e+00> : vector<8xf32>
    %5 = vector.multi_reduction <add>, %4, %cst_2 [0] : vector<16x8xf32> to vector<8xf32>
    %6 = vector.shape_cast %5 : vector<8xf32> to vector<1x8xf32>
    %cst_3 = arith.constant 6.250000e-02 : f32
    %7 = vector.broadcast %cst_3 : f32 to vector<1x8xf32>
    %8 = arith.mulf %3, %7 : vector<1x8xf32>
    %cst_4 = arith.constant 6.250000e-02 : f32
    %9 = vector.broadcast %cst_4 : f32 to vector<1x8xf32>
    %10 = arith.mulf %6, %9 : vector<1x8xf32>
    %11 = arith.mulf %8, %8 : vector<1x8xf32>
    %12 = arith.subf %10, %11 : vector<1x8xf32>
    %cst_5 = arith.constant 0.000000e+00 : f32
    %13 = vector.broadcast %cst_5 : f32 to vector<1x8xf32>
    %14 = arith.maximumf %12, %13 : vector<1x8xf32>
    %cst_6 = arith.constant 9.99999974E-6 : f32
    %15 = vector.broadcast %cst_6 : f32 to vector<1x8xf32>
    %16 = arith.addf %14, %15 : vector<1x8xf32>
    %17 = math.rsqrt %16 : vector<1x8xf32>
    %18 = vector.broadcast %8 : vector<1x8xf32> to vector<16x8xf32>
    %19 = arith.subf %1, %18 : vector<16x8xf32>
    %20 = vector.broadcast %17 : vector<1x8xf32> to vector<16x8xf32>
    %21 = arith.mulf %19, %20 : vector<16x8xf32>
    %c0_7 = arith.constant 0 : index
    %c0_8 = arith.constant 0 : index
    %22 = vector.load %arg6[%c0_7, %c0_8] : memref<16x1xf32, #tpu.memory_space<vmem>>, vector<16x1xf32>
    %23 = vector.broadcast %22 : vector<16x1xf32> to vector<16x8xf32>
    %24 = arith.mulf %21, %23 : vector<16x8xf32>
    %c0_9 = arith.constant 0 : index
    %c0_10 = arith.constant 0 : index
    %25 = vector.load %arg7[%c0_9, %c0_10] : memref<16x1xf32, #tpu.memory_space<vmem>>, vector<16x1xf32>
    %26 = vector.broadcast %25 : vector<16x1xf32> to vector<16x8xf32>
    %27 = arith.addf %24, %26 : vector<16x8xf32>
    %c0_11 = arith.constant 0 : index
    %c0_12 = arith.constant 0 : index
    %c0_13 = arith.constant 0 : index
    %28 = vector.load %arg4[%c0_11, %c0_12, %c0_13] : memref<1x8x8xf32, #tpu.memory_space<vmem>>, vector<1x8x8xf32>
    %29 = vector.shape_cast %28 : vector<1x8x8xf32> to vector<8x8xf32>
    %cst_14 = arith.constant dense<0.000000e+00> : vector<16x8xf32>
    %30 = tpu.matmul %27, %29, %cst_14 {dimension_numbers = #tpu.dot_dimension_numbers<[1], [0], [0], [1], [0, 0, 1, 1], [], []>} : vector<16x8xf32>, vector<8x8xf32>, vector<16x8xf32> -> vector<16x8xf32>
    %c0_15 = arith.constant 0 : index
    %c0_16 = arith.constant 0 : index
    %c0_17 = arith.constant 0 : index
    %31 = vector.load %arg5[%c0_15, %c0_16, %c0_17] : memref<1x1x8xf32, #tpu.memory_space<vmem>>, vector<1x1x8xf32>
    %32 = vector.shape_cast %31 : vector<1x1x8xf32> to vector<1x8xf32>
    %33 = vector.broadcast %32 : vector<1x8xf32> to vector<16x8xf32>
    %34 = arith.addf %30, %33 : vector<16x8xf32>
    %c0_18 = arith.constant 0 : index
    %c0_19 = arith.constant 0 : index
    %c0_20 = arith.constant 0 : index
    %35 = vector.load %arg3[%c0_18, %c0_19, %c0_20] : memref<1x16x8xf32, #tpu.memory_space<vmem>>, vector<1x16x8xf32>
    %36 = vector.shape_cast %35 : vector<1x16x8xf32> to vector<16x8xf32>
    %37 = arith.mulf %34, %36 : vector<16x8xf32>
    %c0_21 = arith.constant 0 : index
    %c0_22 = arith.constant 0 : index
    %c0_23 = arith.constant 0 : index
    %38 = vector.load %arg8[%c0_21, %c0_22, %c0_23] : memref<1x16x8xf32, #tpu.memory_space<vmem>>, vector<1x16x8xf32>
    %39 = vector.shape_cast %38 : vector<1x16x8xf32> to vector<16x8xf32>
    %40 = vector.shape_cast %37 : vector<16x8xf32> to vector<1x16x8xf32>
    tpu.vector_store %arg8[%c0_21, %c0_22, %c0_23], %40 {strides = array<i32>} : memref<1x16x8xf32, #tpu.memory_space<vmem>>, vector<1x16x8xf32>,
    return
  }
  func.func @transform_0(%arg0: i32, %arg1: i32) -> (i32, i32, i32) {
    %c0_i32 = arith.constant 0 : i32
    %c0_i32_0 = arith.constant 0 : i32
    %c0_i32_1 = arith.constant 0 : i32
    return %arg1, %c0_i32, %c0_i32_0 : i32, i32, i32
  }
  func.func @transform_1(%arg0: i32, %arg1: i32) -> (i32, i32, i32) {
    %c0_i32 = arith.constant 0 : i32
    %c0_i32_0 = arith.constant 0 : i32
    return %arg1, %arg0, %c0_i32 : i32, i32, i32
  }
  func.func @transform_2(%arg0: i32, %arg1: i32) -> (i32, i32, i32) {
    %c0_i32 = arith.constant 0 : i32
    %c0_i32_0 = arith.constant 0 : i32
    %c0_i32_1 = arith.constant 0 : i32
    return %arg0, %c0_i32, %c0_i32_0 : i32, i32, i32
  }
  func.func @transform_3(%arg0: i32, %arg1: i32) -> (i32, i32, i32) {
    %c0_i32 = arith.constant 0 : i32
    %c0_i32_0 = arith.constant 0 : i32
    %c0_i32_1 = arith.constant 0 : i32
    return %arg0, %c0_i32, %c0_i32_0 : i32, i32, i32
  }
  func.func @transform_4(%arg0: i32, %arg1: i32) -> (i32, i32) {
    %c0_i32 = arith.constant 0 : i32
    %c0_i32_0 = arith.constant 0 : i32
    return %arg0, %c0_i32 : i32, i32
  }
  func.func @transform_5(%arg0: i32, %arg1: i32) -> (i32, i32) {
    %c0_i32 = arith.constant 0 : i32
    %c0_i32_0 = arith.constant 0 : i32
    return %arg0, %c0_i32 : i32, i32
  }
  func.func @transform_6(%arg0: i32, %arg1: i32) -> (i32, i32, i32) {
    %c0_i32 = arith.constant 0 : i32
    %c0_i32_0 = arith.constant 0 : i32
    return %arg1, %arg0, %c0_i32 : i32, i32, i32
  }
}

</mosaic_0001>

<llo_original>
// kernel: tpu_custom_call.1
$region0: #{tpu_custom_call.1}
  #allocation0 [shape = 'u32[]', space=smem, size = 0x4, offset = 0x4, fixed_abs, tag = 'smem constant byte address 0x4 - core index']
  #allocation1 [shape = 'u32[144,128]{1,0:T(1,128)}', space=vmem, size = 0x12000, scoped, tag = 'internal scratch']
  %s0 = inlined_call_operand.vmem [shape: f32[2,16,8], index: 0, kind: input, shape index: {}]
  %s1 = inlined_call_operand.vmem [shape: f32[2,16,8], index: 1, kind: input, shape index: {}]
  %s2 = inlined_call_operand.vmem [shape: f32[1,8,8], index: 2, kind: input, shape index: {}]
  %s3 = inlined_call_operand.vmem [shape: f32[1,1,8], index: 3, kind: input, shape index: {}]
  %s4 = inlined_call_operand.vmem [shape: f32[16,1], index: 4, kind: input, shape index: {}]
  %s5 = inlined_call_operand.vmem [shape: f32[16,1], index: 5, kind: input, shape index: {}]
  %s6 = inlined_call_operand.vmem [shape: f32[2,16,8], index: 6, kind: output, shape index: {}]
  %s7 = sld [smem:[#allocation0]]
  $region57: #{tpu_custom_call.1} parent=0
    _
  %s9 = ssub.s32 1, %s7
  %s10 = scalar_select 0, %s9, %s7
  loop: start=0, step=1, limit=4
  $region2: #{tpu_custom_call.1} parent=0 // loop_pre_header
    _
  $region3: #{tpu_custom_call.1} parent=0 // loop_header
    %s12 = sphi 0, %s16
    %p13 = scmp.ge.s32.totalorder %s12, 4
    %s19 = sphi 0, %s31
    %s20 = sphi 0, %s27
    %s21 = sphi 0, %s19
    %s22 = sphi 0, %s20
    %s23 = sphi 0, %s21
    %s24 = sphi 0, %s22
    %s34 = sphi 0, %s36
    %s37 = sphi 0, %s34
    %s38 = sphi 0, %s37
    %s54 = sphi 0, %s38
    %s62 = sphi 0, %s64
    %s65 = sphi 0, %s62
    %s66 = sphi 0, %s65
    %s82 = sphi 0, %s66
    %s88 = sphi 0, %s90
    %s91 = sphi 0, %s88
    %s92 = sphi 0, %s91
    %s108 = sphi 0, %s92
    %s114 = sphi 0, %s116
    %s117 = sphi 0, %s114
    %s118 = sphi 0, %s117
    %s134 = sphi 0, %s118
    %s140 = sphi 0, %s142
    %s143 = sphi 0, %s140
    %s144 = sphi 0, %s143
    %s160 = sphi 0, %s144
    %s166 = sphi 0, %s168
    %s169 = sphi 0, %s166
    %s170 = sphi 0, %s169
    %s186 = sphi 0, %s170
    %s194 = sphi 0, %s196
    %s197 = sphi 0, %s194
    %s198 = sphi 0, %s197
    %s214 = sphi 0, %s198
  $region4: #{tpu_custom_call.1} parent=0 // loop_header_branch
    %15 = sbr.rel (%p13) target = $region8
  $region5: #{tpu_custom_call.1} parent=0 // loop_body
    %s17 = ssub.s32 %s12, 1
    %s18 = ssub.s32 %s12, 2
    %s25 = sadd.s32 1, %s20
    %p26 = scmp.ge.s32.totalorder %s25, 2
    %s27 = scalar_select %p26, 0, %s25
    %s28 = sadd.s32 1, %s19
    %s29 = scalar_select %p26, %s28, %s19
    %p30 = scmp.ge.s32.totalorder %s29, 1
    %s31 = scalar_select %p30, 0, %s29
    %s32 = ssub.s32 %s20, %s27
    %p33 = scmp.eq.s32.totalorder %s32, 0
    %s35 = sadd.s32 %s34, 1
    %s36 = scalar_select %p33, %s34, %s35
    %p39 = pneg %p33
    %p40 = scmp.eq.s32.totalorder %s12, 1
    %p41 = por %p39, %p40
    %p42 = scmp.ne.s32.totalorder %s34, %s37
    %p43 = scmp.eq.s32.totalorder %s12, 0
    %p44 = por %p42, %p43
    %p45 = scmp.ne.s32.totalorder %s34, %s37
    %p46 = scmp.eq.s32.totalorder %s17, 1
    %p47 = por %p45, %p46
    %p48 = scmp.ne.s32.totalorder %s37, %s38
    %p49 = scmp.eq.s32.totalorder %s17, 0
    %p50 = por %p48, %p49
    %p51 = scmp.ne.s32.totalorder %s37, %s38
    %p52 = scmp.eq.s32.totalorder %s18, 1
    %p53 = por %p51, %p52
    %p55 = scmp.ne.s32.totalorder %s38, %s54
    %p56 = scmp.eq.s32.totalorder %s18, 0
    %p57 = por %p55, %p56
    %s58 = ssub.s32 %s20, %s27
    %s59 = ssub.s32 %s19, %s31
    %s60 = sor.u32 %s58, %s59
    %p61 = scmp.eq.s32.totalorder %s60, 0
    %s63 = sadd.s32 %s62, 1
    %s64 = scalar_select %p61, %s62, %s63
    %p67 = pneg %p61
    %p68 = scmp.eq.s32.totalorder %s12, 1
    %p69 = por %p67, %p68
    %p70 = scmp.ne.s32.totalorder %s62, %s65
    %p71 = scmp.eq.s32.totalorder %s12, 0
    %p72 = por %p70, %p71
    %p73 = scmp.ne.s32.totalorder %s62, %s65
    %p74 = scmp.eq.s32.totalorder %s17, 1
    %p75 = por %p73, %p74
    %p76 = scmp.ne.s32.totalorder %s65, %s66
    %p77 = scmp.eq.s32.totalorder %s17, 0
    %p78 = por %p76, %p77
    %p79 = scmp.ne.s32.totalorder %s65, %s66
    %p80 = scmp.eq.s32.totalorder %s18, 1
    %p81 = por %p79, %p80
    %p83 = scmp.ne.s32.totalorder %s66, %s82
    %p84 = scmp.eq.s32.totalorder %s18, 0
    %p85 = por %p83, %p84
    %s86 = ssub.s32 %s19, %s31
    %p87 = scmp.eq.s32.totalorder %s86, 0
    %s89 = sadd.s32 %s88, 1
    %s90 = scalar_select %p87, %s88, %s89
    %p93 = pneg %p87
    %p94 = scmp.eq.s32.totalorder %s12, 1
    %p95 = por %p93, %p94
    %p96 = scmp.ne.s32.totalorder %s88, %s91
    %p97 = scmp.eq.s32.totalorder %s12, 0
    %p98 = por %p96, %p97
    %p99 = scmp.ne.s32.totalorder %s88, %s91
    %p100 = scmp.eq.s32.totalorder %s17, 1
    %p101 = por %p99, %p100
    %p102 = scmp.ne.s32.totalorder %s91, %s92
    %p103 = scmp.eq.s32.totalorder %s17, 0
    %p104 = por %p102, %p103
    %p105 = scmp.ne.s32.totalorder %s91, %s92
    %p106 = scmp.eq.s32.totalorder %s18, 1
    %p107 = por %p105, %p106
    %p109 = scmp.ne.s32.totalorder %s92, %s108
    %p110 = scmp.eq.s32.totalorder %s18, 0
    %p111 = por %p109, %p110
    %s112 = ssub.s32 %s19, %s31
    %p113 = scmp.eq.s32.totalorder %s112, 0
    %s115 = sadd.s32 %s114, 1
    %s116 = scalar_select %p113, %s114, %s115
    %p119 = pneg %p113
    %p120 = scmp.eq.s32.totalorder %s12, 1
    %p121 = por %p119, %p120
    %p122 = scmp.ne.s32.totalorder %s114, %s117
    %p123 = scmp.eq.s32.totalorder %s12, 0
    %p124 = por %p122, %p123
    %p125 = scmp.ne.s32.totalorder %s114, %s117
    %p126 = scmp.eq.s32.totalorder %s17, 1
    %p127 = por %p125, %p126
    %p128 = scmp.ne.s32.totalorder %s117, %s118
    %p129 = scmp.eq.s32.totalorder %s17, 0
    %p130 = por %p128, %p129
    %p131 = scmp.ne.s32.totalorder %s117, %s118
    %p132 = scmp.eq.s32.totalorder %s18, 1
    %p133 = por %p131, %p132
    %p135 = scmp.ne.s32.totalorder %s118, %s134
    %p136 = scmp.eq.s32.totalorder %s18, 0
    %p137 = por %p135, %p136
    %s138 = ssub.s32 %s19, %s31
    %p139 = scmp.eq.s32.totalorder %s138, 0
    %s141 = sadd.s32 %s140, 1
    %s142 = scalar_select %p139, %s140, %s141
    %p145 = pneg %p139
    %p146 = scmp.eq.s32.totalorder %s12, 1
    %p147 = por %p145, %p146
    %p148 = scmp.ne.s32.totalorder %s140, %s143
    %p149 = scmp.eq.s32.totalorder %s12, 0
    %p150 = por %p148, %p149
    %p151 = scmp.ne.s32.totalorder %s140, %s143
    %p152 = scmp.eq.s32.totalorder %s17, 1
    %p153 = por %p151, %p152
    %p154 = scmp.ne.s32.totalorder %s143, %s144
    %p155 = scmp.eq.s32.totalorder %s17, 0
    %p156 = por %p154, %p155
    %p157 = scmp.ne.s32.totalorder %s143, %s144
    %p158 = scmp.eq.s32.totalorder %s18, 1
    %p159 = por %p157, %p158
    %p161 = scmp.ne.s32.totalorder %s144, %s160
    %p162 = scmp.eq.s32.totalorder %s18, 0
    %p163 = por %p161, %p162
    %s164 = ssub.s32 %s19, %s31
    %p165 = scmp.eq.s32.totalorder %s164, 0
    %s167 = sadd.s32 %s166, 1
    %s168 = scalar_select %p165, %s166, %s167
    %p171 = pneg %p165
    %p172 = scmp.eq.s32.totalorder %s12, 1
    %p173 = por %p171, %p172
    %p174 = scmp.ne.s32.totalorder %s166, %s169
    %p175 = scmp.eq.s32.totalorder %s12, 0
    %p176 = por %p174, %p175
    %p177 = scmp.ne.s32.totalorder %s166, %s169
    %p178 = scmp.eq.s32.totalorder %s17, 1
    %p179 = por %p177, %p178
    %p180 = scmp.ne.s32.totalorder %s169, %s170
    %p181 = scmp.eq.s32.totalorder %s17, 0
    %p182 = por %p180, %p181
    %p183 = scmp.ne.s32.totalorder %s169, %s170
    %p184 = scmp.eq.s32.totalorder %s18, 1
    %p185 = por %p183, %p184
    %p187 = scmp.ne.s32.totalorder %s170, %s186
    %p188 = scmp.eq.s32.totalorder %s18, 0
    %p189 = por %p187, %p188
    %s190 = ssub.s32 %s20, %s27
    %s191 = ssub.s32 %s19, %s31
    %s192 = sor.u32 %s190, %s191
    %p193 = scmp.eq.s32.totalorder %s192, 0
    %s195 = sadd.s32 %s194, 1
    %s196 = scalar_select %p193, %s194, %s195
    %p199 = pneg %p193
    %p200 = scmp.eq.s32.totalorder %s12, 1
    %p201 = por %p199, %p200
    %p202 = scmp.ne.s32.totalorder %s194, %s197
    %p203 = scmp.eq.s32.totalorder %s12, 0
    %p204 = por %p202, %p203
    %p205 = scmp.ne.s32.totalorder %s194, %s197
    %p206 = scmp.eq.s32.totalorder %s17, 1
    %p207 = por %p205, %p206
    %p208 = scmp.ne.s32.totalorder %s197, %s198
    %p209 = scmp.eq.s32.totalorder %s17, 0
    %p210 = por %p208, %p209
    %p211 = scmp.ne.s32.totalorder %s197, %s198
    %p212 = scmp.eq.s32.totalorder %s18, 1
    %p213 = por %p211, %p212
    %p215 = scmp.ne.s32.totalorder %s198, %s214
    %p216 = scmp.eq.s32.totalorder %s18, 0
    %p217 = por %p215, %p216
    %p218 = scmp.le.s32.totalorder 1, %s12
    %p219 = scmp.lt.s32.totalorder %s12, 3
    %p220 = pnand %p218, %p219
    %p221 = pneg %p220
    // Predicated region
    $region9: #{tpu_custom_call.1} parent=5 // pred_check
      _
    $region10: #{tpu_custom_call.1} parent=5 // pred_check_branch
      %223 = sbr.rel (%p220) target = $region12
    $region11: #{tpu_custom_call.1} parent=5 // pred_region
      %s224 = ssub.s32 %s12, 1
      // Predicated region
      $region13: #{tpu_custom_call.1} parent=11 // pred_check
        %p225 = pneg %p104
      $region14: #{tpu_custom_call.1} parent=11 // pred_check_branch
        %227 = sbr.rel (%p225) target = $region16
      $region15: #{tpu_custom_call.1} parent=11 // pred_region
        %p228 = scmp.lt.s32.totalorder %s21, 0
        %s229 = scalar_select %p228, %s21, 0
        %s230 = smul.addr %s229, 8
        %s231 = scalar_lea.vmem %s2, %s230
      $region16: #{tpu_custom_call.1} parent=11 // pred_fallthru
        _
      // Predicated region
      $region17: #{tpu_custom_call.1} parent=11 // pred_check
        %p232 = pneg %p130
      $region18: #{tpu_custom_call.1} parent=11 // pred_check_branch
        %234 = sbr.rel (%p232) target = $region20
      $region19: #{tpu_custom_call.1} parent=11 // pred_region
        %p235 = scmp.lt.s32.totalorder %s21, 0
        %s236 = scalar_select %p235, %s21, 0
        %s237 = scalar_lea.vmem %s3, %s236
      $region20: #{tpu_custom_call.1} parent=11 // pred_fallthru
        _
      // Predicated region
      $region21: #{tpu_custom_call.1} parent=11 // pred_check
        %p238 = pneg %p156
      $region22: #{tpu_custom_call.1} parent=11 // pred_check_branch
        %240 = sbr.rel (%p238) target = $region24
      $region23: #{tpu_custom_call.1} parent=11 // pred_region
        %s241 = smul.u32 2, %s21
        %p242 = scmp.lt.s32.totalorder %s241, 1
        %s243 = scalar_select %p242, %s241, 1
        %s244 = smul.addr %s243, 8
        %s245 = scalar_lea.vmem %s4, %s244
        %s246 = smul.u32 2, %s21
      $region24: #{tpu_custom_call.1} parent=11 // pred_fallthru
        _
      // Predicated region
      $region25: #{tpu_custom_call.1} parent=11 // pred_check
        %p247 = pneg %p182
      $region26: #{tpu_custom_call.1} parent=11 // pred_check_branch
        %249 = sbr.rel (%p247) target = $region28
      $region27: #{tpu_custom_call.1} parent=11 // pred_region
        %s250 = smul.u32 2, %s21
        %p251 = scmp.lt.s32.totalorder %s250, 1
        %s252 = scalar_select %p251, %s250, 1
        %s253 = smul.addr %s252, 8
        %s254 = scalar_lea.vmem %s5, %s253
        %s255 = smul.u32 2, %s21
      $region28: #{tpu_custom_call.1} parent=11 // pred_fallthru
        _
    $region12: #{tpu_custom_call.1} parent=5 // pred_fallthru
      _
    %p256 = scmp.lt.s32.totalorder %s12, 2
    // Predicated region
    $region29: #{tpu_custom_call.1} parent=5 // pred_check
      %p257 = pneg %p256
    $region30: #{tpu_custom_call.1} parent=5 // pred_check_branch
      %259 = sbr.rel (%p257) target = $region32
    $region31: #{tpu_custom_call.1} parent=5 // pred_region
      // Predicated region
      $region33: #{tpu_custom_call.1} parent=31 // pred_check
        %p260 = pneg %p44
      $region34: #{tpu_custom_call.1} parent=31 // pred_check_branch
        %262 = sbr.rel (%p260) target = $region36
      $region35: #{tpu_custom_call.1} parent=31 // pred_region
        %p263 = scmp.lt.s32.totalorder %s20, 1
        %s264 = scalar_select %p263, %s20, 1
        %s265 = smul.addr %s264, 2
        %s266 = smul.addr %s265, 8
        %s267 = scalar_lea.vmem %s0, %s266
      $region36: #{tpu_custom_call.1} parent=31 // pred_fallthru
        _
      // Predicated region
      $region37: #{tpu_custom_call.1} parent=31 // pred_check
        %p268 = pneg %p72
      $region38: #{tpu_custom_call.1} parent=31 // pred_check_branch
        %270 = sbr.rel (%p268) target = $region40
      $region39: #{tpu_custom_call.1} parent=31 // pred_region
        %s271 = smul.u32 2, %s19
        %p272 = scmp.lt.s32.totalorder %s20, 1
        %s273 = scalar_select %p272, %s20, 1
        %p274 = scmp.lt.s32.totalorder %s271, 1
        %s275 = scalar_select %p274, %s271, 1
        %s276 = smul.addr %s273, 2
        %s277 = sadd.s32 %s275, %s276
        %s278 = smul.addr %s277, 8
        %s279 = scalar_lea.vmem %s1, %s278
        %s280 = smul.u32 2, %s19
      $region40: #{tpu_custom_call.1} parent=31 // pred_fallthru
        _
    $region32: #{tpu_custom_call.1} parent=5 // pred_fallthru
      _
    %p281 = scmp.le.s32.totalorder 1, %s12
    %p282 = scmp.lt.s32.totalorder %s12, 3
    %p283 = pnand %p281, %p282
    %p284 = pneg %p283
    // Predicated region
    $region41: #{tpu_custom_call.1} parent=5 // pred_check
      _
    $region42: #{tpu_custom_call.1} parent=5 // pred_check_branch
      %286 = sbr.rel (%p283) target = $region44
    $region43: #{tpu_custom_call.1} parent=5 // pred_region
      %s287 = ssub.s32 %s12, 1
      %p288 = scmp.lt.s32.totalorder %s22, 1
      %s289 = scalar_select %p288, %s22, 1
      %s290 = smul.addr %s289, 2
      %s291 = smul.addr %s290, 8
      %s292 = scalar_lea.vmem %s0, %s291
      %p293 = pneg %p50
      %p294 = pneg %p47
      %s295 = smul.u32 2, %s21
      %p296 = scmp.lt.s32.totalorder %s22, 1
      %s297 = scalar_select %p296, %s22, 1
      %p298 = scmp.lt.s32.totalorder %s295, 1
      %s299 = scalar_select %p298, %s295, 1
      %s300 = smul.addr %s297, 2
      %s301 = sadd.s32 %s299, %s300
      %s302 = smul.addr %s301, 8
      %s303 = scalar_lea.vmem %s1, %s302
      %p304 = pneg %p78
      %p305 = pneg %p75
      %p306 = scmp.lt.s32.totalorder %s21, 0
      %s307 = scalar_select %p306, %s21, 0
      %s308 = smul.addr %s307, 8
      %s309 = scalar_lea.vmem %s2, %s308
      %p310 = pneg %p104
      %p311 = pneg %p101
      %p312 = scmp.lt.s32.totalorder %s21, 0
      %s313 = scalar_select %p312, %s21, 0
      %s314 = scalar_lea.vmem %s3, %s313
      %p315 = pneg %p130
      %p316 = pneg %p127
      %s317 = smul.u32 2, %s21
      %p318 = scmp.lt.s32.totalorder %s317, 1
      %s319 = scalar_select %p318, %s317, 1
      %s320 = smul.addr %s319, 8
      %s321 = scalar_lea.vmem %s4, %s320
      %p322 = pneg %p156
      %p323 = pneg %p153
      %s324 = smul.u32 2, %s21
      %p325 = scmp.lt.s32.totalorder %s324, 1
      %s326 = scalar_select %p325, %s324, 1
      %s327 = smul.addr %s326, 8
      %s328 = scalar_lea.vmem %s5, %s327
      %p329 = pneg %p182
      %p330 = pneg %p179
      %p331 = pneg %p210
      %p332 = pneg %p207
      %s333 = smul.u32 2, %s21
      %p334 = scmp.lt.s32.totalorder %s22, 1
      %s335 = scalar_select %p334, %s22, 1
      %p336 = scmp.lt.s32.totalorder %s333, 1
      %s337 = scalar_select %p336, %s333, 1
      %s338 = smul.addr %s335, 2
      %s339 = sadd.s32 %s337, %s338
      %s340 = smul.addr %s339, 8
      %s341 = scalar_lea.vmem %s6, %s340
      %p342 = scmp.lt.s32.totalorder %s22, 1
      %s343 = scalar_select %p342, %s22, 1
      %s344 = smul.addr %s343, 2
      %s345 = smul.addr %s344, 8
      %s346 = scalar_lea.vmem %s0, %s345
      %s347 = smul.u32 2, %s21
      %p348 = scmp.lt.s32.totalorder %s22, 1
      %s349 = scalar_select %p348, %s22, 1
      %p350 = scmp.lt.s32.totalorder %s347, 1
      %s351 = scalar_select %p350, %s347, 1
      %s352 = smul.addr %s349, 2
      %s353 = sadd.s32 %s351, %s352
      %s354 = smul.addr %s353, 8
      %s355 = scalar_lea.vmem %s1, %s354
      %s356 = smul.u32 2, %s21
      %p357 = scmp.lt.s32.totalorder %s21, 0
      %s358 = scalar_select %p357, %s21, 0
      %s359 = smul.addr %s358, 8
      %s360 = scalar_lea.vmem %s2, %s359
      %p361 = scmp.lt.s32.totalorder %s21, 0
      %s362 = scalar_select %p361, %s21, 0
      %s363 = scalar_lea.vmem %s3, %s362
      %s364 = smul.u32 2, %s21
      %p365 = scmp.lt.s32.totalorder %s364, 1
      %s366 = scalar_select %p365, %s364, 1
      %s367 = smul.addr %s366, 8
      %s368 = scalar_lea.vmem %s4, %s367
      %s369 = smul.u32 2, %s21
      %s370 = smul.u32 2, %s21
      %p371 = scmp.lt.s32.totalorder %s370, 1
      %s372 = scalar_select %p371, %s370, 1
      %s373 = smul.addr %s372, 8
      %s374 = scalar_lea.vmem %s5, %s373
      %s375 = smul.u32 2, %s21
      %s376 = smul.u32 2, %s21
      %p377 = scmp.lt.s32.totalorder %s22, 1
      %s378 = scalar_select %p377, %s22, 1
      %p379 = scmp.lt.s32.totalorder %s376, 1
      %s380 = scalar_select %p379, %s376, 1
      %s381 = smul.addr %s378, 2
      %s382 = sadd.s32 %s380, %s381
      %s383 = smul.addr %s382, 8
      %s384 = scalar_lea.vmem %s6, %s383
      %s385 = smul.u32 2, %s21
      %v386 = vld [vmem:[%s346] sm:$0xff]
      %v387 = vld [vmem:[%s346 + $0x8] sm:$0xff]
      %vm388 = vcmask 64512
      %v389 = vsel %vm388, %v386, 0.0
      %v390 = vsel %vm388, %v387, 0.0
      %v391 = vadd.f32 %v389, %v390
      %v392 = vrot.slane %v391, 4
      %v393 = vadd.f32 %v391, %v392
      %v394 = vrot.slane %v393, 2
      %v395 = vadd.f32 %v393, %v394
      %v396 = vrot.slane %v395, 1
      %v397 = vadd.f32 %v395, %v396
      %v398 = vmul.f32 %v386, %v386
      %v399 = vmul.f32 %v387, %v387
      %v400 = vsel %vm388, %v398, 0.0
      %v401 = vsel %vm388, %v399, 0.0
      %v402 = vadd.f32 %v400, %v401
      %v403 = vrot.slane %v402, 4
      %v404 = vadd.f32 %v402, %v403
      %v405 = vrot.slane %v404, 2
      %v406 = vadd.f32 %v404, %v405
      %v407 = vrot.slane %v406, 1
      %v408 = vadd.f32 %v406, %v407
      %v409 = vmul.f32 %v397, 0.0625
      %v410 = vmul.f32 %v408, 0.0625
      %v411 = vmul.f32 %v409, %v409
      %v412 = vsub.f32 %v410, %v411
      %v413 = vmax.f32 %v412, 0.0
      %v414 = vadd.f32 %v413, 1e-05
      %v415 = vrsqrt.pop %v414
      %v416 = vsub.f32 %v386, %v409
      %v417 = vsub.f32 %v387, %v409
      %v418 = vmul.f32 %v416, %v415
      %v419 = vmul.f32 %v417, %v415
      %v420 = vld [vmem:[%s368] sm:$0xff]
      %v421 = vld [vmem:[%s368 + $0x8] sm:$0xff]
      %423 = vset.pattern.permute.xlu0 0
      %424 = vperm.xlu0 %423, %v420
      %v425 = vpop.permute.xlu0 %424
      %428 = vset.pattern.permute.xlu0 0
      %429 = vperm.xlu0 %428, %v421
      %v430 = vpop.permute.xlu0 %429
      %v432 = vmul.f32 %v418, %v425
      %v433 = vmul.f32 %v419, %v430
      %v434 = vld [vmem:[%s374] sm:$0xff]
      %v435 = vld [vmem:[%s374 + $0x8] sm:$0xff]
      %437 = vset.pattern.permute.xlu0 0
      %438 = vperm.xlu0 %437, %v434
      %v439 = vpop.permute.xlu0 %438
      %442 = vset.pattern.permute.xlu0 0
      %443 = vperm.xlu0 %442, %v435
      %v444 = vpop.permute.xlu0 %443
      %v446 = vadd.f32 %v432, %v439
      %v447 = vadd.f32 %v433, %v444
      %v448 = vld [vmem:[%s360] sm:$0xff]
      %v449 = vld [vmem:[%s363] sm:$0x1]
      %v451 = vlaneseq
      %v452 = vshrl.u32 %v451, 7
      %v453 = vsub.s32 0, %v452
      %v454 = vrot.slane %v449, %v453
      %v457 = vsel %vm388, %v446, 0
      %v460 = vsel %vm388, %v447, 0
      %462 = vmatprep.subr.mxu0 0.0
      %463 = vmatpush1.msra.mxu0 %v448
      %464 = vmatprep.subr.mxu0 0.0
      %465 = vmatpush1.msra.mxu0 0.0
      %466 = vmatprep.subr.mxu0 0.0
      %467 = vmatpush1.msra.mxu0 0.0
      %468 = vmatprep.subr.mxu0 0.0
      %469 = vmatpush1.msra.mxu0 0.0
      %470 = vmatprep.subr.mxu0 0.0
      %471 = vmatpush1.msra.mxu0 0.0
      %472 = vmatprep.subr.mxu0 0.0
      %473 = vmatpush1.msra.mxu0 0.0
      %474 = vmatprep.subr.mxu0 0.0
      %475 = vmatpush1.msra.mxu0 0.0
      %476 = vmatprep.subr.mxu0 0.0
      %477 = vmatpush1.msra.mxu0 0.0
      %478 = vmatprep.subr.mxu0 0.0
      %479 = vmatpush1.msra.mxu0 0.0
      %480 = vmatprep.subr.mxu0 0.0
      %481 = vmatpush1.msra.mxu0 0.0
      %482 = vmatprep.subr.mxu0 0.0
      %483 = vmatpush1.msra.mxu0 0.0
      %484 = vmatprep.subr.mxu0 0.0
      %485 = vmatpush1.msra.mxu0 0.0
      %486 = vmatprep.subr.mxu0 0.0
      %487 = vmatpush1.msra.mxu0 0.0
      %488 = vmatprep.subr.mxu0 0.0
      %489 = vmatpush1.msra.mxu0 0.0
      %490 = vmatprep.subr.mxu0 0.0
      %491 = vmatpush1.msra.mxu0 0.0
      %492 = vmatprep.subr.mxu0 0.0
      %493 = vmatpush1.msra.mxu0 0.0
      %494 = vmatprep.subr.mxu0 0.0
      %495 = vmatpush1.msra.mxu0 0.0
      %496 = vmatprep.subr.mxu0 0.0
      %497 = vmatpush1.msra.mxu0 0.0
      %498 = vmatprep.subr.mxu0 0.0
      %499 = vmatpush1.msra.mxu0 0.0
      %500 = vmatprep.subr.mxu0 0.0
      %501 = vmatpush1.msra.mxu0 0.0
      %502 = vmatprep.subr.mxu0 0.0
      %503 = vmatpush1.msra.mxu0 0.0
      %504 = vmatprep.subr.mxu0 0.0
      %505 = vmatpush1.msra.mxu0 0.0
      %506 = vmatprep.subr.mxu0 0.0
      %507 = vmatpush1.msra.mxu0 0.0
      %508 = vmatprep.subr.mxu0 0.0
      %509 = vmatpush1.msra.mxu0 0.0
      %510 = vmatprep.subr.mxu0 0.0
      %511 = vmatpush1.msra.mxu0 0.0
      %512 = vmatprep.subr.mxu0 0.0
      %513 = vmatpush1.msra.mxu0 0.0
      %514 = vmatprep.subr.mxu0 0.0
      %515 = vmatpush1.msra.mxu0 0.0
      %516 = vmatprep.subr.mxu0 0.0
      %517 = vmatpush1.msra.mxu0 0.0
      %518 = vmatprep.subr.mxu0 0.0
      %519 = vmatpush1.msra.mxu0 0.0
      %520 = vmatprep.subr.mxu0 0.0
      %521 = vmatpush1.msra.mxu0 0.0
      %522 = vmatprep.subr.mxu0 0.0
      %523 = vmatpush1.msra.mxu0 0.0
      %524 = vmatprep.subr.mxu0 0.0
      %525 = vmatpush1.msra.mxu0 0.0
      %526 = vmatprep.mubr.f32.mxu0 0.0
      %527 = vmatmul.mubr.f32.gmra.mrb[0].mxu0 %v457
      %v528 = vpop.f32.mrb[0].mxu0
      %v529 = vadd.f32 %v454, %v528
      %v530 = vpop.f32.mrb[0].mxu0
      %531 = vmatprep.mubr.f32.mxu0 0.0
      %532 = vmatmul.mubr.f32.gmra.mrb[0].mxu0 %v460
      %v533 = vpop.f32.mrb[0].mxu0
      %v534 = vadd.f32 %v454, %v533
      %v535 = vpop.f32.mrb[0].mxu0
      %536 = vdwg.mxu0
      %v537 = vld [vmem:[%s355] sm:$0xff]
      %v538 = vld [vmem:[%s355 + $0x8] sm:$0xff]
      %v539 = vmul.f32 %v529, %v537
      %v540 = vmul.f32 %v534, %v538
      %541 = vst.msk [vmem:[%s384] sm:$0xff] %vm388, %v539
      %542 = vst.msk [vmem:[%s384 + $0x8] sm:$0xff] %vm388, %v540
      %s543 = smul.u32 2, %s21
      %p544 = scmp.lt.s32.totalorder %s22, 1
      %s545 = scalar_select %p544, %s22, 1
      %p546 = scmp.lt.s32.totalorder %s543, 1
      %s547 = scalar_select %p546, %s543, 1
      %s548 = smul.addr %s545, 2
      %s549 = sadd.s32 %s547, %s548
      %s550 = smul.addr %s549, 8
      %s551 = scalar_lea.vmem %s6, %s550
      // Predicated region
      $region45: #{tpu_custom_call.1} parent=43 // pred_check
        %p552 = pneg %p207
      $region46: #{tpu_custom_call.1} parent=43 // pred_check_branch
        %554 = sbr.rel (%p552) target = $region48
      $region47: #{tpu_custom_call.1} parent=43 // pred_region
        %s555 = smul.u32 2, %s21
      $region48: #{tpu_custom_call.1} parent=43 // pred_fallthru
        _
    $region44: #{tpu_custom_call.1} parent=5 // pred_fallthru
      _
    %p556 = scmp.le.s32.totalorder 2, %s12
    // Predicated region
    $region49: #{tpu_custom_call.1} parent=5 // pred_check
      %p557 = pneg %p556
    $region50: #{tpu_custom_call.1} parent=5 // pred_check_branch
      %559 = sbr.rel (%p557) target = $region52
    $region51: #{tpu_custom_call.1} parent=5 // pred_region
      %s560 = ssub.s32 %s12, 2
      // Predicated region
      $region53: #{tpu_custom_call.1} parent=51 // pred_check
        %p561 = pneg %p213
      $region54: #{tpu_custom_call.1} parent=51 // pred_check_branch
        %563 = sbr.rel (%p561) target = $region56
      $region55: #{tpu_custom_call.1} parent=51 // pred_region
        %s564 = smul.u32 2, %s23
        %p565 = scmp.lt.s32.totalorder %s24, 1
        %s566 = scalar_select %p565, %s24, 1
        %p567 = scmp.lt.s32.totalorder %s564, 1
        %s568 = scalar_select %p567, %s564, 1
        %s569 = smul.addr %s566, 2
        %s570 = sadd.s32 %s568, %s569
        %s571 = smul.addr %s570, 8
        %s572 = scalar_lea.vmem %s6, %s571
      $region56: #{tpu_custom_call.1} parent=51 // pred_fallthru
        _
    $region52: #{tpu_custom_call.1} parent=5 // pred_fallthru
      _
  $region6: #{tpu_custom_call.1} parent=0 // loop_footer
    %s16 = sadd.s32 1, %s12
  $region7: #{tpu_custom_call.1} parent=0 // loop_footer_branch
    %11 = sbr.rel target = $region3
  $region8: #{tpu_custom_call.1} parent=0 // loop_exit
    _

</llo_original>
